<compile_context>
chip_gen: v7x
topology: tpu7x:2x2x1
jax: 0.10.0
libtpu: 0.0.40
codegen_flags: <defaults>
</compile_context>

<pallas_src>
import functools

import jax
import jax.numpy as jnp
from jax.experimental import pallas as pl
from jax.experimental.pallas import tpu as pltpu


def _se_kernel(x_ref, w1_ref, w2_ref, o_ref, *, spatial_last: bool):
    # x_ref/o_ref: (nb, C, HW) if spatial_last else (nb, HW, C)
    # w1_ref:      (Cr, C)   -- PyTorch Linear(C -> Cr).weight
    # w2_ref:      (C, Cr)   -- PyTorch Linear(Cr -> C).weight
    x = x_ref[...]                                   # native dtype; no full-tile upcast
    spatial_axis = 2 if spatial_last else 1

    # --- Squeeze: global average pool with f32 accumulation only ---
    m = jnp.mean(x, axis=spatial_axis, dtype=jnp.float32)            # (nb, C)

    # --- Excitation: the FCs are tiny, so broadcast-multiply + lane reductions
    #     (VPU/XLU) instead of sub-tile MXU matmuls. Weights stay in their
    #     native PyTorch layouts (no wrapper transpose).
    w1 = w1_ref[...].astype(jnp.float32)                             # (Cr, C)
    w2 = w2_ref[...].astype(jnp.float32)                             # (C, Cr)

    # hidden[n, r] = relu( sum_c m[n, c] * W1[r, c] )
    hidden = jnp.sum(m[:, None, :] * w1[None, :, :], axis=-1)        # (nb, Cr)
    hidden = jnp.maximum(hidden, 0.0)

    # gate[n, c] = hsigmoid( sum_r hidden[n, r] * W2[c, r] )
    gate = jnp.sum(hidden[:, None, :] * w2[None, :, :], axis=-1)     # (nb, C)
    gate = jnp.clip(gate + 3.0, 0.0, 6.0) * (1.0 / 6.0)
    gate = gate.astype(x.dtype)

    # --- Scale: channel-wise rescale of the streamed block (native dtype) ---
    if spatial_last:
        o_ref[...] = (x * gate[:, :, None]).astype(o_ref.dtype)
    else:
        o_ref[...] = (x * gate[:, None, :]).astype(o_ref.dtype)


def _pick_nb(n: int, per_sample_bytes: int, target_bytes: int) -> int:
    """Largest nb dividing n with nb*per_sample ~<= target, keeping >=2 grid steps."""
    nb = max(1, min(n, target_bytes // max(per_sample_bytes, 1)))
    if n >= 2:
        nb = min(nb, -(-n // 2))   # >= 2 grid steps so v7x megacore uses both TCs
    nb = int(nb)
    while n % nb != 0:             # clean tiling: no partial batch blocks
        nb -= 1
    return nb


def _se_pallas_3d(x3, w1, w2, *, spatial_last: bool, block_bytes: int = 2 << 20):
    n = x3.shape[0]
    if spatial_last:
        _, c, hw = x3.shape
    else:
        _, hw, c = x3.shape
    cr = w1.shape[0]

    per_sample = c * hw * x3.dtype.itemsize
    nb = _pick_nb(n, per_sample, block_bytes)
    blk = (nb, c, hw) if spatial_last else (nb, hw, c)

    flops = 2 * n * c * hw + 4 * n * c * cr          # pool adds + rescale muls + tiny FCs
    bytes_accessed = (2 * x3.size * x3.dtype.itemsize
                      + w1.size * w1.dtype.itemsize
                      + w2.size * w2.dtype.itemsize)

    kernel = functools.partial(_se_kernel, spatial_last=spatial_last)

    return pl.pallas_call(
        kernel,
        out_shape=jax.ShapeDtypeStruct(x3.shape, x3.dtype),
        grid_spec=pltpu.PrefetchScalarGridSpec(
            num_scalar_prefetch=0,
            grid=(n // nb,),
            in_specs=[
                pl.BlockSpec(blk, lambda b: (b, 0, 0)),      # nb samples / step
                pl.BlockSpec((cr, c), lambda b: (0, 0)),     # full tiny weight W1
                pl.BlockSpec((c, cr), lambda b: (0, 0)),     # full tiny weight W2
            ],
            out_specs=pl.BlockSpec(blk, lambda b: (b, 0, 0)),
        ),
        compiler_params=pltpu.CompilerParams(
            dimension_semantics=("parallel",),               # megacore-shard batch on v7x
        ),
        cost_estimate=pl.CostEstimate(
            flops=flops, transcendentals=0, bytes_accessed=bytes_accessed),
    )(x3, w1, w2)


def se_module_pallas(x, w1, w2, *, block_bytes: int = 2 << 20):
    """Fused SEModule forward, NCHW activations (the PyTorch layout).

    Args:
      x:  (N, C, H, W) activations.
      w1: (C//r, C)  -- Linear(channel, channel//reduction, bias=False).weight
      w2: (C, C//r)  -- Linear(channel//reduction, channel, bias=False).weight
    Returns:
      (N, C, H, W) = x * hsigmoid(relu(avgpool(x) @ w1.T) @ w2.T)[:, :, None, None]
    """
    n, c, h, w = x.shape
    cr = w1.shape[0]
    assert w1.shape == (cr, c) and w2.shape == (c, cr)
    x3 = x.reshape(n, c, h * w)                       # free reshape; H*W on lanes
    out3 = _se_pallas_3d(x3, w1, w2, spatial_last=True, block_bytes=block_bytes)
    return out3.reshape(n, c, h, w)


def se_module_pallas_nhwc(x, w1, w2, *, block_bytes: int = 2 << 20):
    """Same op for NHWC activations: C sits on lanes (lane-dense when C is large
    and H*W is not a multiple of 128, i.e. typical MobileNet SE blocks)."""
    n, h, w, c = x.shape
    cr = w1.shape[0]
    assert w1.shape == (cr, c) and w2.shape == (c, cr)
    x3 = x.reshape(n, h * w, c)                       # free reshape; C on lanes
    out3 = _se_pallas_3d(x3, w1, w2, spatial_last=False, block_bytes=block_bytes)
    return out3.reshape(n, h, w, c)


def _se_reference(x, w1, w2):
    """Pure-JAX reference matching the PyTorch SEModule forward (NCHW)."""
    y = jnp.mean(x.astype(jnp.float32), axis=(2, 3))          # (N, C)
    y = jnp.maximum(y @ w1.astype(jnp.float32).T, 0.0)        # (N, Cr)
    y = y @ w2.astype(jnp.float32).T                          # (N, C)
    y = jnp.clip(y + 3.0, 0.0, 6.0) / 6.0                     # Hsigmoid
    return (x.astype(jnp.float32) * y[:, :, None, None]).astype(x.dtype)


if __name__ == "__main__":
    key = jax.random.PRNGKey(0)
    k_x, k_w1, k_w2 = jax.random.split(key, 3)

    # Small shapes consistent with the module: batch=2, channels=16,
    # spatial=16x16, reduction=4 -> hidden channels = 4.
    N, C, H, W = 2, 16, 16, 16
    reduction = 4
    Cr = C // reduction

    x = jax.random.normal(k_x, (N, C, H, W), dtype=jnp.float32)
    w1 = jax.random.normal(k_w1, (Cr, C), dtype=jnp.float32) * 0.5   # Linear(C->Cr).weight
    w2 = jax.random.normal(k_w2, (C, Cr), dtype=jnp.float32) * 0.5   # Linear(Cr->C).weight

    y_ref = _se_reference(x, w1, w2)

    # NCHW path (spatial on lanes).
    y = jax.block_until_ready(se_module_pallas(x, w1, w2))
    assert y.shape == x.shape and y.dtype == x.dtype
    assert bool(jnp.allclose(y, y_ref, rtol=1e-5, atol=1e-5)), "NCHW mismatch vs reference"

    # NHWC path (channels on lanes) -- the lane-dense layout for realistic SE shapes.
    x_nhwc = jnp.transpose(x, (0, 2, 3, 1))
    y_nhwc = jax.block_until_ready(se_module_pallas_nhwc(x_nhwc, w1, w2))
    assert bool(jnp.allclose(y_nhwc, jnp.transpose(y_ref, (0, 2, 3, 1)),
                             rtol=1e-5, atol=1e-5)), "NHWC mismatch vs reference"

    print("KERNEL_OK")
</pallas_src>

<mosaic_0001>
module attributes {stable_mosaic.version = 11 : i64} {
  func.func @_se_kernel(%arg0: i32, %arg1: memref<1x16x256xf32, #tpu.memory_space<vmem>>, %arg2: memref<4x16xf32, #tpu.memory_space<vmem>>, %arg3: memref<16x4xf32, #tpu.memory_space<vmem>>, %arg4: memref<1x16x256xf32, #tpu.memory_space<vmem>>) attributes {dimension_semantics = [#tpu.dimension_semantics<parallel>], iteration_bounds = array<i64: 2>, scalar_prefetch = 0 : i64, scratch_operands = 0 : i64, tpu.core_type = #tpu.core_type<tc>, window_params = [{transform_indices = @transform_0, window_bounds = array<i64: 1, 16, 256>}, {pipeline_mode = #tpu.pipeline_mode<synchronous>, transform_indices = @transform_1, window_bounds = array<i64: 4, 16>}, {pipeline_mode = #tpu.pipeline_mode<synchronous>, transform_indices = @transform_2, window_bounds = array<i64: 16, 4>}, {transform_indices = @transform_3, window_bounds = array<i64: 1, 16, 256>}]} {
    %c0 = arith.constant 0 : index
    %c0_0 = arith.constant 0 : index
    %c0_1 = arith.constant 0 : index
    %0 = vector.load %arg1[%c0, %c0_0, %c0_1] : memref<1x16x256xf32, #tpu.memory_space<vmem>>, vector<1x16x256xf32>
    %cst = arith.constant dense<0.000000e+00> : vector<1x16xf32>
    %1 = vector.multi_reduction <add>, %0, %cst [2] : vector<1x16x256xf32> to vector<1x16xf32>
    %cst_2 = arith.constant 2.560000e+02 : f32
    %2 = vector.broadcast %cst_2 : f32 to vector<1x16xf32>
    %3 = arith.divf %1, %2 : vector<1x16xf32>
    %c0_3 = arith.constant 0 : index
    %c0_4 = arith.constant 0 : index
    %4 = vector.load %arg2[%c0_3, %c0_4] : memref<4x16xf32, #tpu.memory_space<vmem>>, vector<4x16xf32>
    %c0_5 = arith.constant 0 : index
    %c0_6 = arith.constant 0 : index
    %5 = vector.load %arg3[%c0_5, %c0_6] : memref<16x4xf32, #tpu.memory_space<vmem>>, vector<16x4xf32>
    %6 = vector.shape_cast %3 : vector<1x16xf32> to vector<1x1x16xf32>
    %7 = vector.shape_cast %4 : vector<4x16xf32> to vector<1x4x16xf32>
    %8 = vector.broadcast %6 : vector<1x1x16xf32> to vector<1x4x16xf32>
    %9 = arith.mulf %8, %7 : vector<1x4x16xf32>
    %cst_7 = arith.constant dense<0.000000e+00> : vector<1x4xf32>
    %10 = vector.multi_reduction <add>, %9, %cst_7 [2] : vector<1x4x16xf32> to vector<1x4xf32>
    %cst_8 = arith.constant 0.000000e+00 : f32
    %11 = vector.broadcast %cst_8 : f32 to vector<1x4xf32>
    %12 = arith.maximumf %10, %11 : vector<1x4xf32>
    %13 = vector.shape_cast %12 : vector<1x4xf32> to vector<1x1x4xf32>
    %14 = vector.shape_cast %5 : vector<16x4xf32> to vector<1x16x4xf32>
    %15 = vector.broadcast %13 : vector<1x1x4xf32> to vector<1x16x4xf32>
    %16 = arith.mulf %15, %14 : vector<1x16x4xf32>
    %cst_9 = arith.constant dense<0.000000e+00> : vector<1x16xf32>
    %17 = vector.multi_reduction <add>, %16, %cst_9 [2] : vector<1x16x4xf32> to vector<1x16xf32>
    %cst_10 = arith.constant 3.000000e+00 : f32
    %18 = vector.broadcast %cst_10 : f32 to vector<1x16xf32>
    %19 = arith.addf %17, %18 : vector<1x16xf32>
    %cst_11 = arith.constant 0.000000e+00 : f32
    %cst_12 = arith.constant 6.000000e+00 : f32
    %20 = vector.broadcast %cst_11 : f32 to vector<1x16xf32>
    %21 = arith.maximumf %20, %19 : vector<1x16xf32>
    %22 = vector.broadcast %cst_12 : f32 to vector<1x16xf32>
    %23 = arith.minimumf %22, %21 : vector<1x16xf32>
    %cst_13 = arith.constant 0.166666672 : f32
    %24 = vector.broadcast %cst_13 : f32 to vector<1x16xf32>
    %25 = arith.mulf %23, %24 : vector<1x16xf32>
    %26 = vector.shape_cast %25 : vector<1x16xf32> to vector<1x16x1xf32>
    %27 = vector.broadcast %26 : vector<1x16x1xf32> to vector<1x16x256xf32>
    %28 = arith.mulf %0, %27 : vector<1x16x256xf32>
    %c0_14 = arith.constant 0 : index
    %c0_15 = arith.constant 0 : index
    %c0_16 = arith.constant 0 : index
    %29 = vector.load %arg4[%c0_14, %c0_15, %c0_16] : memref<1x16x256xf32, #tpu.memory_space<vmem>>, vector<1x16x256xf32>
    tpu.vector_store %arg4[%c0_14, %c0_15, %c0_16], %28 {strides = array<i32>} : memref<1x16x256xf32, #tpu.memory_space<vmem>>, vector<1x16x256xf32>,
    return
  }
  func.func @transform_0(%arg0: i32) -> (i32, i32, i32) {
    %c0_i32 = arith.constant 0 : i32
    %c0_i32_0 = arith.constant 0 : i32
    %c0_i32_1 = arith.constant 0 : i32
    return %arg0, %c0_i32, %c0_i32_0 : i32, i32, i32
  }
  func.func @transform_1(%arg0: i32) -> (i32, i32) {
    %c0_i32 = arith.constant 0 : i32
    %c0_i32_0 = arith.constant 0 : i32
    %c0_i32_1 = arith.constant 0 : i32
    return %c0_i32, %c0_i32_0 : i32, i32
  }
  func.func @transform_2(%arg0: i32) -> (i32, i32) {
    %c0_i32 = arith.constant 0 : i32
    %c0_i32_0 = arith.constant 0 : i32
    %c0_i32_1 = arith.constant 0 : i32
    return %c0_i32, %c0_i32_0 : i32, i32
  }
  func.func @transform_3(%arg0: i32) -> (i32, i32, i32) {
    %c0_i32 = arith.constant 0 : i32
    %c0_i32_0 = arith.constant 0 : i32
    %c0_i32_1 = arith.constant 0 : i32
    return %arg0, %c0_i32, %c0_i32_0 : i32, i32, i32
  }
}

</mosaic_0001>

<llo_original>
// kernel: tpu_custom_call.1
$region0: #{tpu_custom_call.1}
  #allocation0 [shape = 'u32[]', space=smem, size = 0x4, offset = 0x4, fixed_abs, tag = 'smem constant byte address 0x4 - core index']
  #allocation1 [shape = 'u32[144,128]{1,0:T(1,128)}', space=vmem, size = 0x12000, scoped, tag = 'internal scratch']
  %s0 = inlined_call_operand.hbm [shape: f32[2,16,256], index: 0, kind: input, shape index: {}]
  %s1 = inlined_call_operand.vmem [shape: f32[4,16], index: 1, kind: input, shape index: {}]
  %s2 = inlined_call_operand.vmem [shape: f32[16,4], index: 2, kind: input, shape index: {}]
  %s3 = inlined_call_operand.hbm [shape: f32[2,16,256], index: 3, kind: output, shape index: {}]
  %s4 = sld [smem:[#allocation0]]
  $region49: #{tpu_custom_call.1} parent=0
    _
  %s6 = ssub.s32 1, %s4
  %s7 = scalar_select 0, %s6, %s4
  $region1: #{tpu_custom_call.1} parent=0
    #allocation2 [shape = 'u8[32768]{0}', space=vmem, size = 0x8000, scoped, tag = 'input window, operand 0']
    #allocation3 [shape = 's32[2]{0}', space=sflag, size = 0x8, scoped, tag = 'scoped memory for tpu_custom_call.1']
    #allocation4 [shape = 's32[2]{0}', space=sflag, size = 0x8, scoped, tag = 'scoped memory for tpu_custom_call.1']
    #allocation5 [shape = 'u8[32768]{0}', space=vmem, size = 0x8000, scoped, tag = 'output window, operand 0']
    %8 = vsyncpa [#allocation3], 0
    %s9 = scalar_lea.sflag [#allocation3], 1
    %10 = vsyncpa %s9, 0
    %11 = vsyncpa [#allocation4], 0
    %s12 = scalar_lea.sflag [#allocation4], 1
    %13 = vsyncpa %s12, 0
    loop: start=0, step=1, limit=4
    $region2: #{tpu_custom_call.1} parent=1 // loop_pre_header
      _
    $region3: #{tpu_custom_call.1} parent=1 // loop_header
      %s15 = sphi 0, %s19
      %p16 = scmp.ge.s32.totalorder %s15, 4
      %s25 = sphi 0, %s27
      %s28 = sphi 0, %s25
      %s29 = sphi 0, %s28
      %s45 = sphi 0, %s29
      %s49 = sphi 0, %s49
      %s51 = sphi 0, %s49
      %s52 = sphi 0, %s51
      %s66 = sphi 0, %s52
      %s70 = sphi 0, %s70
      %s72 = sphi 0, %s70
      %s73 = sphi 0, %s72
      %s87 = sphi 0, %s73
      %s93 = sphi 0, %s95
      %s96 = sphi 0, %s93
      %s97 = sphi 0, %s96
      %s113 = sphi 0, %s97
    $region4: #{tpu_custom_call.1} parent=1 // loop_header_branch
      %18 = sbr.rel (%p16) target = $region8
    $region5: #{tpu_custom_call.1} parent=1 // loop_body
      %s20 = ssub.s32 %s15, 1
      %s21 = ssub.s32 %s15, 2
      %s22 = sadd.s32 %s15, 1
      %s23 = ssub.s32 %s15, %s22
      %p24 = scmp.eq.s32.totalorder %s23, 0
      %s26 = sadd.s32 %s25, 1
      %s27 = scalar_select %p24, %s25, %s26
      %p30 = pneg %p24
      %p31 = scmp.eq.s32.totalorder %s15, 1
      %p32 = por %p30, %p31
      %p33 = scmp.ne.s32.totalorder %s25, %s28
      %p34 = scmp.eq.s32.totalorder %s15, 0
      %p35 = por %p33, %p34
      %p36 = scmp.ne.s32.totalorder %s25, %s28
      %p37 = scmp.eq.s32.totalorder %s20, 1
      %p38 = por %p36, %p37
      %p39 = scmp.ne.s32.totalorder %s28, %s29
      %p40 = scmp.eq.s32.totalorder %s20, 0
      %p41 = por %p39, %p40
      %p42 = scmp.ne.s32.totalorder %s28, %s29
      %p43 = scmp.eq.s32.totalorder %s21, 1
      %p44 = por %p42, %p43
      %p46 = scmp.ne.s32.totalorder %s29, %s45
      %p47 = scmp.eq.s32.totalorder %s21, 0
      %p48 = por %p46, %p47
      %s50 = sadd.s32 %s49, 1
      %p53 = scmp.eq.s32.totalorder %s15, 1
      %p54 = scmp.ne.s32.totalorder %s49, %s51
      %p55 = scmp.eq.s32.totalorder %s15, 0
      %p56 = por %p54, %p55
      %p57 = scmp.ne.s32.totalorder %s49, %s51
      %p58 = scmp.eq.s32.totalorder %s20, 1
      %p59 = por %p57, %p58
      %p60 = scmp.ne.s32.totalorder %s51, %s52
      %p61 = scmp.eq.s32.totalorder %s20, 0
      %p62 = por %p60, %p61
      %p63 = scmp.ne.s32.totalorder %s51, %s52
      %p64 = scmp.eq.s32.totalorder %s21, 1
      %p65 = por %p63, %p64
      %p67 = scmp.ne.s32.totalorder %s52, %s66
      %p68 = scmp.eq.s32.totalorder %s21, 0
      %p69 = por %p67, %p68
      %s71 = sadd.s32 %s70, 1
      %p74 = scmp.eq.s32.totalorder %s15, 1
      %p75 = scmp.ne.s32.totalorder %s70, %s72
      %p76 = scmp.eq.s32.totalorder %s15, 0
      %p77 = por %p75, %p76
      %p78 = scmp.ne.s32.totalorder %s70, %s72
      %p79 = scmp.eq.s32.totalorder %s20, 1
      %p80 = por %p78, %p79
      %p81 = scmp.ne.s32.totalorder %s72, %s73
      %p82 = scmp.eq.s32.totalorder %s20, 0
      %p83 = por %p81, %p82
      %p84 = scmp.ne.s32.totalorder %s72, %s73
      %p85 = scmp.eq.s32.totalorder %s21, 1
      %p86 = por %p84, %p85
      %p88 = scmp.ne.s32.totalorder %s73, %s87
      %p89 = scmp.eq.s32.totalorder %s21, 0
      %p90 = por %p88, %p89
      %s91 = ssub.s32 %s15, %s22
      %p92 = scmp.eq.s32.totalorder %s91, 0
      %s94 = sadd.s32 %s93, 1
      %s95 = scalar_select %p92, %s93, %s94
      %p98 = pneg %p92
      %p99 = scmp.eq.s32.totalorder %s15, 1
      %p100 = por %p98, %p99
      %p101 = scmp.ne.s32.totalorder %s93, %s96
      %p102 = scmp.eq.s32.totalorder %s15, 0
      %p103 = por %p101, %p102
      %p104 = scmp.ne.s32.totalorder %s93, %s96
      %p105 = scmp.eq.s32.totalorder %s20, 1
      %p106 = por %p104, %p105
      %p107 = scmp.ne.s32.totalorder %s96, %s97
      %p108 = scmp.eq.s32.totalorder %s20, 0
      %p109 = por %p107, %p108
      %p110 = scmp.ne.s32.totalorder %s96, %s97
      %p111 = scmp.eq.s32.totalorder %s21, 1
      %p112 = por %p110, %p111
      %p114 = scmp.ne.s32.totalorder %s97, %s113
      %p115 = scmp.eq.s32.totalorder %s21, 0
      %p116 = por %p114, %p115
      %p117 = scmp.le.s32.totalorder 1, %s15
      %p118 = scmp.lt.s32.totalorder %s15, 3
      %p119 = pnand %p117, %p118
      %p120 = pneg %p119
      // Predicated region
      $region9: #{tpu_custom_call.1} parent=5 // pred_check
        _
      $region10: #{tpu_custom_call.1} parent=5 // pred_check_branch
        %122 = sbr.rel (%p119) target = $region12
      $region11: #{tpu_custom_call.1} parent=5 // pred_region
        %s123 = ssub.s32 %s15, 1
        // Predicated region
        $region13: #{tpu_custom_call.1} parent=11 // pred_check
          %p124 = pneg %p62
        $region14: #{tpu_custom_call.1} parent=11 // pred_check_branch
          %126 = sbr.rel (%p124) target = $region16
        $region15: #{tpu_custom_call.1} parent=11 // pred_region
          _
        $region16: #{tpu_custom_call.1} parent=11 // pred_fallthru
          _
        // Predicated region
        $region17: #{tpu_custom_call.1} parent=11 // pred_check
          %p127 = pneg %p83
        $region18: #{tpu_custom_call.1} parent=11 // pred_check_branch
          %129 = sbr.rel (%p127) target = $region20
        $region19: #{tpu_custom_call.1} parent=11 // pred_region
          _
        $region20: #{tpu_custom_call.1} parent=11 // pred_fallthru
          _
      $region12: #{tpu_custom_call.1} parent=5 // pred_fallthru
        _
      %p130 = scmp.lt.s32.totalorder %s15, 2
      // Predicated region
      $region21: #{tpu_custom_call.1} parent=5 // pred_check
        %p131 = pneg %p130
      $region22: #{tpu_custom_call.1} parent=5 // pred_check_branch
        %133 = sbr.rel (%p131) target = $region24
      $region23: #{tpu_custom_call.1} parent=5 // pred_region
        // Predicated region
        $region25: #{tpu_custom_call.1} parent=23 // pred_check
          %p134 = pneg %p35
        $region26: #{tpu_custom_call.1} parent=23 // pred_check_branch
          %136 = sbr.rel (%p134) target = $region28
        $region27: #{tpu_custom_call.1} parent=23 // pred_region
          %s137 = sand.u32 %s25, 1
          %s138 = scalar_lea.sflag [#allocation3], %s137
          %s139 = sand.u32 %s25, 1
          %s140 = smul.addr %s139, 32
          %s141 = scalar_lea.vmem [#allocation2], %s140
          %s143 = ssub.s32 512, 512
          %144 = vsyncadd %s138, %s143
          %s145 = smul.addr %s15, 4
          %s146 = smul.addr %s145, 128
          %s147 = scalar_lea.hbm %s0, %s146
          %s148 = sshll.u32 %s141, 4
          %s149 = int_to_ptr.vmem [resolvable:$true] %s148
          %154 = dma.hbm_to_vmem [thread:$0]  %s147, 512, %s149, %s138, 256, 256, 16
        $region28: #{tpu_custom_call.1} parent=23 // pred_fallthru
          _
      $region24: #{tpu_custom_call.1} parent=5 // pred_fallthru
        _
      %p155 = scmp.le.s32.totalorder 1, %s15
      %p156 = scmp.lt.s32.totalorder %s15, 3
      %p157 = pnand %p155, %p156
      %p158 = pneg %p157
      // Predicated region
      $region29: #{tpu_custom_call.1} parent=5 // pred_check
        _
      $region30: #{tpu_custom_call.1} parent=5 // pred_check_branch
        %160 = sbr.rel (%p157) target = $region32
      $region31: #{tpu_custom_call.1} parent=5 // pred_region
        %s161 = ssub.s32 %s15, 1
        %s162 = sand.u32 %s28, 1
        %s163 = scalar_lea.sflag [#allocation3], %s162
        %s164 = sand.u32 %s28, 1
        %s165 = smul.addr %s164, 32
        %s166 = scalar_lea.vmem [#allocation2], %s165
        // Predicated region
        $region33: #{tpu_custom_call.1} parent=31 // pred_check
          %p167 = pneg %p41
        $region34: #{tpu_custom_call.1} parent=31 // pred_check_branch
          %169 = sbr.rel (%p167) target = $region36
        $region35: #{tpu_custom_call.1} parent=31 // pred_region
          %170 = dma.done %s163, 512
        $region36: #{tpu_custom_call.1} parent=31 // pred_fallthru
          _
        %s171 = sand.u32 %s28, 1
        %s172 = scalar_lea.sflag [#allocation3], %s171
        %s173 = sand.u32 %s28, 1
        %s174 = smul.addr %s173, 32
        %s175 = scalar_lea.vmem [#allocation2], %s174
        %p176 = pneg %p41
        %p177 = pneg %p38
        %p178 = pneg %p62
        %p179 = pneg %p59
        %p180 = pneg %p83
        %p181 = pneg %p80
        %p182 = pneg %p109
        %p183 = pneg %p106
        %s184 = sand.u32 %s96, 1
        %s185 = scalar_lea.sflag [#allocation4], %s184
        %s186 = sand.u32 %s96, 1
        %s187 = smul.addr %s186, 32
        %s188 = scalar_lea.vmem [#allocation5], %s187
        %v189 = vld [vmem:[%s166] sm:$0xff]
        %v190 = vld [vmem:[%s166 + $0x8] sm:$0xff]
        %v191 = vld [vmem:[%s166 + $0x10] sm:$0xff]
        %v192 = vld [vmem:[%s166 + $0x18] sm:$0xff]
        %v193 = vadd.f32 %v189, %v190
        %194 = vadd.xlane.f32.xlu0 %v193
        %v195 = vpop.xlane.xlu0 %194
        %v196 = vadd.f32 %v191, %v192
        %197 = vadd.xlane.f32.xlu0 %v196
        %v198 = vpop.xlane.xlu0 %197
        %v199 = vrcp.pop 256.0
        %v200 = vmul.f32 %v195, %v199
        %v201 = vmul.f32 %v198, %v199
        %v202 = vld [vmem:[%s1] sm:$0xf]
        %v203 = vld [vmem:[%s2] sm:$0xff]
        %v204 = vld [vmem:[%s2 + $0x8] sm:$0xff]
        %v206 = vlaneseq
        %v207 = vshrl.u32 %v206, 7
        %v208 = vsub.s32 0, %v207
        %v209 = vrot.slane %v202, %v208
        %211 = vbcast.lane.b32.xlu0 %v209, 256
        %v212 = vpop.permute.xlu0 %211
        %s214 = sor.u32 256, 8
        %215 = vbcast.lane.b32.xlu0 %v209, %s214
        %v216 = vpop.permute.xlu0 %215
        %v217 = vlaneseq
        %v218 = vshrl.u32 %v217, 7
        %v219 = vsub.s32 1, %v218
        %v220 = vrot.slane %v202, %v219
        %222 = vbcast.lane.b32.xlu0 %v220, 256
        %v223 = vpop.permute.xlu0 %222
        %s225 = sor.u32 256, 8
        %226 = vbcast.lane.b32.xlu0 %v220, %s225
        %v227 = vpop.permute.xlu0 %226
        %v228 = vlaneseq
        %v229 = vshrl.u32 %v228, 7
        %v230 = vsub.s32 2, %v229
        %v231 = vrot.slane %v202, %v230
        %233 = vbcast.lane.b32.xlu0 %v231, 256
        %v234 = vpop.permute.xlu0 %233
        %s236 = sor.u32 256, 8
        %237 = vbcast.lane.b32.xlu0 %v231, %s236
        %v238 = vpop.permute.xlu0 %237
        %v239 = vlaneseq
        %v240 = vshrl.u32 %v239, 7
        %v241 = vsub.s32 3, %v240
        %v242 = vrot.slane %v202, %v241
        %244 = vbcast.lane.b32.xlu0 %v242, 256
        %v245 = vpop.permute.xlu0 %244
        %s247 = sor.u32 256, 8
        %248 = vbcast.lane.b32.xlu0 %v242, %s247
        %v249 = vpop.permute.xlu0 %248
        %v258 = vmul.f32 %v200, %v212
        %v259 = vmul.f32 %v201, %v216
        %v260 = vmul.f32 %v200, %v223
        %v261 = vmul.f32 %v201, %v227
        %v262 = vmul.f32 %v200, %v234
        %v263 = vmul.f32 %v201, %v238
        %v264 = vmul.f32 %v200, %v245
        %v265 = vmul.f32 %v201, %v249
        %274 = vset.pattern.permute.xlu0 0
        %275 = vperm.xlu0 %274, %v258
        %v276 = vpop.permute.xlu0 %275
        %277 = vset.pattern.permute.xlu0 0
        %278 = vperm.xlu0 %277, %v259
        %v279 = vpop.permute.xlu0 %278
        %280 = vset.pattern.permute.xlu0 0
        %281 = vperm.xlu0 %280, %v260
        %v282 = vpop.permute.xlu0 %281
        %283 = vset.pattern.permute.xlu0 0
        %284 = vperm.xlu0 %283, %v261
        %v285 = vpop.permute.xlu0 %284
        %286 = vset.pattern.permute.xlu0 0
        %287 = vperm.xlu0 %286, %v262
        %v288 = vpop.permute.xlu0 %287
        %289 = vset.pattern.permute.xlu0 0
        %290 = vperm.xlu0 %289, %v263
        %v291 = vpop.permute.xlu0 %290
        %292 = vset.pattern.permute.xlu0 0
        %293 = vperm.xlu0 %292, %v264
        %v294 = vpop.permute.xlu0 %293
        %295 = vset.pattern.permute.xlu0 0
        %296 = vperm.xlu0 %295, %v265
        %v297 = vpop.permute.xlu0 %296
        %v298 = vlaneseq
        %v299 = vand.u32 %v298, 127
        %v300 = vlaneseq
        %v301 = vshrl.u32 %v300, 7
        %v302 = vsub.s32 %v299, %v301
        %v303 = vrot.slane %v276, %v302
        %v304 = vadd.s32 %v299, 4294967288
        %v305 = vlaneseq
        %v306 = vshrl.u32 %v305, 7
        %v307 = vsub.s32 %v304, %v306
        %v308 = vrot.slane %v279, %v307
        %vm309 = vcmask 130112
        %v310 = vsel %vm309, %v308, %v303
        %v311 = vlaneseq
        %v312 = vshrl.u32 %v311, 7
        %v313 = vsub.s32 %v299, %v312
        %v314 = vrot.slane %v282, %v313
        %v315 = vlaneseq
        %v316 = vshrl.u32 %v315, 7
        %v317 = vsub.s32 %v304, %v316
        %v318 = vrot.slane %v285, %v317
        %v319 = vsel %vm309, %v318, %v314
        %v320 = vlaneseq
        %v321 = vshrl.u32 %v320, 7
        %v322 = vsub.s32 %v299, %v321
        %v323 = vrot.slane %v288, %v322
        %v324 = vlaneseq
        %v325 = vshrl.u32 %v324, 7
        %v326 = vsub.s32 %v304, %v325
        %v327 = vrot.slane %v291, %v326
        %v328 = vsel %vm309, %v327, %v323
        %v329 = vlaneseq
        %v330 = vshrl.u32 %v329, 7
        %v331 = vsub.s32 %v299, %v330
        %v332 = vrot.slane %v294, %v331
        %v333 = vlaneseq
        %v334 = vshrl.u32 %v333, 7
        %v335 = vsub.s32 %v304, %v334
        %v336 = vrot.slane %v297, %v335
        %v337 = vsel %vm309, %v336, %v332
        %vm338 = vcmask 1041409
        %v339 = vsel %vm338, %v319, %v310
        %vm340 = vcmask 1042434
        %v341 = vsel %vm340, %v328, %v339
        %vm342 = vcmask 1043459
        %v343 = vsel %vm342, %v337, %v341
        %vm345 = vcmask 125952
        %v346 = vsel %vm345, %v343, 0.0
        %347 = vadd.xlane.f32.xlu0 %v346
        %v348 = vpop.xlane.xlu0 %347
        %v349 = vmax.f32 %v348, 0.0
        %v352 = vlaneseq
        %v353 = vshrl.u32 %v352, 7
        %v354 = vsub.s32 0, %v353
        %v355 = vrot.slane %v203, %v354
        %357 = vbcast.lane.b32.xlu0 %v355, 256
        %v358 = vpop.permute.xlu0 %357
        %v359 = vlaneseq
        %v360 = vshrl.u32 %v359, 7
        %v361 = vsub.s32 1, %v360
        %v362 = vrot.slane %v203, %v361
        %364 = vbcast.lane.b32.xlu0 %v362, 256
        %v365 = vpop.permute.xlu0 %364
        %v366 = vlaneseq
        %v367 = vshrl.u32 %v366, 7
        %v368 = vsub.s32 2, %v367
        %v369 = vrot.slane %v203, %v368
        %371 = vbcast.lane.b32.xlu0 %v369, 256
        %v372 = vpop.permute.xlu0 %371
        %v373 = vlaneseq
        %v374 = vshrl.u32 %v373, 7
        %v375 = vsub.s32 3, %v374
        %v376 = vrot.slane %v203, %v375
        %378 = vbcast.lane.b32.xlu0 %v376, 256
        %v379 = vpop.permute.xlu0 %378
        %v380 = vlaneseq
        %v381 = vshrl.u32 %v380, 7
        %v382 = vsub.s32 4, %v381
        %v383 = vrot.slane %v203, %v382
        %385 = vbcast.lane.b32.xlu0 %v383, 256
        %v386 = vpop.permute.xlu0 %385
        %v387 = vlaneseq
        %v388 = vshrl.u32 %v387, 7
        %v389 = vsub.s32 5, %v388
        %v390 = vrot.slane %v203, %v389
        %392 = vbcast.lane.b32.xlu0 %v390, 256
        %v393 = vpop.permute.xlu0 %392
        %v394 = vlaneseq
        %v395 = vshrl.u32 %v394, 7
        %v396 = vsub.s32 6, %v395
        %v397 = vrot.slane %v203, %v396
        %399 = vbcast.lane.b32.xlu0 %v397, 256
        %v400 = vpop.permute.xlu0 %399
        %v401 = vlaneseq
        %v402 = vshrl.u32 %v401, 7
        %v403 = vsub.s32 7, %v402
        %v404 = vrot.slane %v203, %v403
        %406 = vbcast.lane.b32.xlu0 %v404, 256
        %v407 = vpop.permute.xlu0 %406
        %v408 = vlaneseq
        %v409 = vshrl.u32 %v408, 7
        %v410 = vsub.s32 0, %v409
        %v411 = vrot.slane %v204, %v410
        %413 = vbcast.lane.b32.xlu0 %v411, 256
        %v414 = vpop.permute.xlu0 %413
        %v415 = vlaneseq
        %v416 = vshrl.u32 %v415, 7
        %v417 = vsub.s32 1, %v416
        %v418 = vrot.slane %v204, %v417
        %420 = vbcast.lane.b32.xlu0 %v418, 256
        %v421 = vpop.permute.xlu0 %420
        %v422 = vlaneseq
        %v423 = vshrl.u32 %v422, 7
        %v424 = vsub.s32 2, %v423
        %v425 = vrot.slane %v204, %v424
        %427 = vbcast.lane.b32.xlu0 %v425, 256
        %v428 = vpop.permute.xlu0 %427
        %v429 = vlaneseq
        %v430 = vshrl.u32 %v429, 7
        %v431 = vsub.s32 3, %v430
        %v432 = vrot.slane %v204, %v431
        %434 = vbcast.lane.b32.xlu0 %v432, 256
        %v435 = vpop.permute.xlu0 %434
        %v436 = vlaneseq
        %v437 = vshrl.u32 %v436, 7
        %v438 = vsub.s32 4, %v437
        %v439 = vrot.slane %v204, %v438
        %441 = vbcast.lane.b32.xlu0 %v439, 256
        %v442 = vpop.permute.xlu0 %441
        %v443 = vlaneseq
        %v444 = vshrl.u32 %v443, 7
        %v445 = vsub.s32 5, %v444
        %v446 = vrot.slane %v204, %v445
        %448 = vbcast.lane.b32.xlu0 %v446, 256
        %v449 = vpop.permute.xlu0 %448
        %v450 = vlaneseq
        %v451 = vshrl.u32 %v450, 7
        %v452 = vsub.s32 6, %v451
        %v453 = vrot.slane %v204, %v452
        %455 = vbcast.lane.b32.xlu0 %v453, 256
        %v456 = vpop.permute.xlu0 %455
        %v457 = vlaneseq
        %v458 = vshrl.u32 %v457, 7
        %v459 = vsub.s32 7, %v458
        %v460 = vrot.slane %v204, %v459
        %462 = vbcast.lane.b32.xlu0 %v460, 256
        %v463 = vpop.permute.xlu0 %462
        %v480 = vmul.f32 %v349, %v358
        %v481 = vmul.f32 %v349, %v365
        %v482 = vmul.f32 %v349, %v372
        %v483 = vmul.f32 %v349, %v379
        %v484 = vmul.f32 %v349, %v386
        %v485 = vmul.f32 %v349, %v393
        %v486 = vmul.f32 %v349, %v400
        %v487 = vmul.f32 %v349, %v407
        %v488 = vmul.f32 %v349, %v414
        %v489 = vmul.f32 %v349, %v421
        %v490 = vmul.f32 %v349, %v428
        %v491 = vmul.f32 %v349, %v435
        %v492 = vmul.f32 %v349, %v442
        %v493 = vmul.f32 %v349, %v449
        %v494 = vmul.f32 %v349, %v456
        %v495 = vmul.f32 %v349, %v463
        %512 = vset.pattern.permute.xlu0 0
        %513 = vperm.xlu0 %512, %v480
        %v514 = vpop.permute.xlu0 %513
        %515 = vset.pattern.permute.xlu0 0
        %516 = vperm.xlu0 %515, %v481
        %v517 = vpop.permute.xlu0 %516
        %518 = vset.pattern.permute.xlu0 0
        %519 = vperm.xlu0 %518, %v482
        %v520 = vpop.permute.xlu0 %519
        %521 = vset.pattern.permute.xlu0 0
        %522 = vperm.xlu0 %521, %v483
        %v523 = vpop.permute.xlu0 %522
        %524 = vset.pattern.permute.xlu0 0
        %525 = vperm.xlu0 %524, %v484
        %v526 = vpop.permute.xlu0 %525
        %527 = vset.pattern.permute.xlu0 0
        %528 = vperm.xlu0 %527, %v485
        %v529 = vpop.permute.xlu0 %528
        %530 = vset.pattern.permute.xlu0 0
        %531 = vperm.xlu0 %530, %v486
        %v532 = vpop.permute.xlu0 %531
        %533 = vset.pattern.permute.xlu0 0
        %534 = vperm.xlu0 %533, %v487
        %v535 = vpop.permute.xlu0 %534
        %536 = vset.pattern.permute.xlu0 0
        %537 = vperm.xlu0 %536, %v488
        %v538 = vpop.permute.xlu0 %537
        %539 = vset.pattern.permute.xlu0 0
        %540 = vperm.xlu0 %539, %v489
        %v541 = vpop.permute.xlu0 %540
        %542 = vset.pattern.permute.xlu0 0
        %543 = vperm.xlu0 %542, %v490
        %v544 = vpop.permute.xlu0 %543
        %545 = vset.pattern.permute.xlu0 0
        %546 = vperm.xlu0 %545, %v491
        %v547 = vpop.permute.xlu0 %546
        %548 = vset.pattern.permute.xlu0 0
        %549 = vperm.xlu0 %548, %v492
        %v550 = vpop.permute.xlu0 %549
        %551 = vset.pattern.permute.xlu0 0
        %552 = vperm.xlu0 %551, %v493
        %v553 = vpop.permute.xlu0 %552
        %554 = vset.pattern.permute.xlu0 0
        %555 = vperm.xlu0 %554, %v494
        %v556 = vpop.permute.xlu0 %555
        %557 = vset.pattern.permute.xlu0 0
        %558 = vperm.xlu0 %557, %v495
        %v559 = vpop.permute.xlu0 %558
        %v560 = vlaneseq
        %v561 = vshrl.u32 %v560, 7
        %v562 = vsub.s32 %v299, %v561
        %v563 = vrot.slane %v514, %v562
        %v564 = vlaneseq
        %v565 = vshrl.u32 %v564, 7
        %v566 = vsub.s32 %v299, %v565
        %v567 = vrot.slane %v517, %v566
        %v568 = vlaneseq
        %v569 = vshrl.u32 %v568, 7
        %v570 = vsub.s32 %v299, %v569
        %v571 = vrot.slane %v520, %v570
        %v572 = vlaneseq
        %v573 = vshrl.u32 %v572, 7
        %v574 = vsub.s32 %v299, %v573
        %v575 = vrot.slane %v523, %v574
        %v576 = vlaneseq
        %v577 = vshrl.u32 %v576, 7
        %v578 = vsub.s32 %v299, %v577
        %v579 = vrot.slane %v526, %v578
        %v580 = vlaneseq
        %v581 = vshrl.u32 %v580, 7
        %v582 = vsub.s32 %v299, %v581
        %v583 = vrot.slane %v529, %v582
        %v584 = vlaneseq
        %v585 = vshrl.u32 %v584, 7
        %v586 = vsub.s32 %v299, %v585
        %v587 = vrot.slane %v532, %v586
        %v588 = vlaneseq
        %v589 = vshrl.u32 %v588, 7
        %v590 = vsub.s32 %v299, %v589
        %v591 = vrot.slane %v535, %v590
        %v592 = vlaneseq
        %v593 = vshrl.u32 %v592, 7
        %v594 = vsub.s32 %v299, %v593
        %v595 = vrot.slane %v538, %v594
        %v596 = vlaneseq
        %v597 = vshrl.u32 %v596, 7
        %v598 = vsub.s32 %v299, %v597
        %v599 = vrot.slane %v541, %v598
        %v600 = vlaneseq
        %v601 = vshrl.u32 %v600, 7
        %v602 = vsub.s32 %v299, %v601
        %v603 = vrot.slane %v544, %v602
        %v604 = vlaneseq
        %v605 = vshrl.u32 %v604, 7
        %v606 = vsub.s32 %v299, %v605
        %v607 = vrot.slane %v547, %v606
        %v608 = vlaneseq
        %v609 = vshrl.u32 %v608, 7
        %v610 = vsub.s32 %v299, %v609
        %v611 = vrot.slane %v550, %v610
        %v612 = vlaneseq
        %v613 = vshrl.u32 %v612, 7
        %v614 = vsub.s32 %v299, %v613
        %v615 = vrot.slane %v553, %v614
        %v616 = vlaneseq
        %v617 = vshrl.u32 %v616, 7
        %v618 = vsub.s32 %v299, %v617
        %v619 = vrot.slane %v556, %v618
        %v620 = vlaneseq
        %v621 = vshrl.u32 %v620, 7
        %v622 = vsub.s32 %v299, %v621
        %v623 = vrot.slane %v559, %v622
        %v624 = vsel %vm338, %v567, %v563
        %v625 = vsel %vm340, %v571, %v624
        %v626 = vsel %vm342, %v575, %v625
        %vm627 = vcmask 1044484
        %v628 = vsel %vm627, %v579, %v626
        %vm629 = vcmask 1045509
        %v630 = vsel %vm629, %v583, %v628
        %vm631 = vcmask 1046534
        %v632 = vsel %vm631, %v587, %v630
        %vm633 = vcmask 1047559
        %v634 = vsel %vm633, %v591, %v632
        %v635 = vsel %vm338, %v599, %v595
        %v636 = vsel %vm340, %v603, %v635
        %v637 = vsel %vm342, %v607, %v636
        %v638 = vsel %vm627, %v611, %v637
        %v639 = vsel %vm629, %v615, %v638
        %v640 = vsel %vm631, %v619, %v639
        %v641 = vsel %vm633, %v623, %v640
        %vm644 = vcmask 31744
        %v645 = vsel %vm644, %v634, 0.0
        %646 = vadd.xlane.f32.xlu0 %v645
        %v647 = vpop.xlane.xlu0 %646
        %v648 = vsel %vm644, %v641, 0.0
        %649 = vadd.xlane.f32.xlu0 %v648
        %v650 = vpop.xlane.xlu0 %649
        %v651 = vadd.f32 %v647, 3.0
        %v652 = vadd.f32 %v650, 3.0
        %v653 = vmax.f32 %v651, 0.0
        %v654 = vmax.f32 %v652, 0.0
        %v655 = vmin.f32 %v653, 6.0
        %v656 = vmin.f32 %v654, 6.0
        %v657 = vmul.f32 %v655, 0.16666667
        %v658 = vmul.f32 %v656, 0.16666667
        %v659 = vmul.f32 %v189, %v657
        %v660 = vmul.f32 %v190, %v657
        %v661 = vmul.f32 %v191, %v658
        %v662 = vmul.f32 %v192, %v658
        %663 = vst [vmem:[%s188] sm:$0xff] %v659
        %664 = vst [vmem:[%s188 + $0x8] sm:$0xff] %v660
        %665 = vst [vmem:[%s188 + $0x10] sm:$0xff] %v661
        %666 = vst [vmem:[%s188 + $0x18] sm:$0xff] %v662
        %s667 = sand.u32 %s96, 1
        %s668 = scalar_lea.sflag [#allocation4], %s667
        %s669 = sand.u32 %s96, 1
        %s670 = smul.addr %s669, 32
        %s671 = scalar_lea.vmem [#allocation5], %s670
        // Predicated region
        $region37: #{tpu_custom_call.1} parent=31 // pred_check
          %p672 = pneg %p106
        $region38: #{tpu_custom_call.1} parent=31 // pred_check_branch
          %674 = sbr.rel (%p672) target = $region40
        $region39: #{tpu_custom_call.1} parent=31 // pred_region
          %s676 = ssub.s32 512, 512
          %677 = vsyncadd %s668, %s676
          %s678 = smul.addr %s20, 4
          %s679 = smul.addr %s678, 128
          %s680 = scalar_lea.hbm %s3, %s679
          %s681 = sshll.u32 %s671, 4
          %s682 = int_to_ptr.vmem [resolvable:$true] %s681
          %687 = dma.vmem_to_hbm [thread:$0]  %s682, 512, %s680, %s668, 256, 256, 16
        $region40: #{tpu_custom_call.1} parent=31 // pred_fallthru
          _
      $region32: #{tpu_custom_call.1} parent=5 // pred_fallthru
        _
      %p688 = scmp.le.s32.totalorder 2, %s15
      // Predicated region
      $region41: #{tpu_custom_call.1} parent=5 // pred_check
        %p689 = pneg %p688
      $region42: #{tpu_custom_call.1} parent=5 // pred_check_branch
        %691 = sbr.rel (%p689) target = $region44
      $region43: #{tpu_custom_call.1} parent=5 // pred_region
        %s692 = ssub.s32 %s15, 2
        // Predicated region
        $region45: #{tpu_custom_call.1} parent=43 // pred_check
          %p693 = pneg %p112
        $region46: #{tpu_custom_call.1} parent=43 // pred_check_branch
          %695 = sbr.rel (%p693) target = $region48
        $region47: #{tpu_custom_call.1} parent=43 // pred_region
          %s696 = sand.u32 %s97, 1
          %s697 = scalar_lea.sflag [#allocation4], %s696
          %s698 = sand.u32 %s97, 1
          %s699 = smul.addr %s698, 32
          %s700 = scalar_lea.vmem [#allocation5], %s699
          %701 = dma.done %s697, 512
        $region48: #{tpu_custom_call.1} parent=43 // pred_fallthru
          _
      $region44: #{tpu_custom_call.1} parent=5 // pred_fallthru
        _
    $region6: #{tpu_custom_call.1} parent=1 // loop_footer
      %s19 = sadd.s32 1, %s15
    $region7: #{tpu_custom_call.1} parent=1 // loop_footer_branch
      %14 = sbr.rel target = $region3
    $region8: #{tpu_custom_call.1} parent=1 // loop_exit
      _
    %702 = vsyncpa [#allocation3], 1
    %s703 = scalar_lea.sflag [#allocation3], 1
    %704 = vsyncpa %s703, 1
    %705 = vsyncpa [#allocation4], 1
    %s706 = scalar_lea.sflag [#allocation4], 1
    %707 = vsyncpa %s706, 1

</llo_original>
